<compile_context>
chip_gen: v6e
topology: v6e:2x2x1
jax: 0.10.0
libtpu: 0.0.40
codegen_flags: <defaults>
</compile_context>

<pallas_src>
import math

import jax
import jax.numpy as jnp
from jax.experimental import pallas as pl
from jax.experimental.pallas import tpu as pltpu

_TEN_OVER_LN10 = 10.0 / math.log(10.0)   # 10*log10(r) == _TEN_OVER_LN10 * ln(r)


def _round_up(x, m):
    return ((x + m - 1) // m) * m


def _sisnr_kernel(x_ref, t_ref, out_ref, dot_acc, tt_acc, xx_acc):
    """One (bm, tk) tile of the streaming SI-SNR reduction.

    grid = (batch_tiles, time_tiles); axis 1 is the reduction axis, so the
    three (bm, 1) f32 accumulators persist in VMEM scratch across it.
    """
    k = pl.program_id(1)

    @pl.when(k == 0)
    def _init():
        dot_acc[...] = jnp.zeros_like(dot_acc)
        tt_acc[...] = jnp.zeros_like(tt_acc)
        xx_acc[...] = jnp.zeros_like(xx_acc)

    x = x_ref[...].astype(jnp.float32)   # degraded / denoised signal
    t = t_ref[...].astype(jnp.float32)   # clean target signal

    dot_acc[...] += jnp.sum(t * x, axis=-1, keepdims=True)
    tt_acc[...] += jnp.sum(t * t, axis=-1, keepdims=True)
    xx_acc[...] += jnp.sum(x * x, axis=-1, keepdims=True)

    @pl.when(k == pl.num_programs(1) - 1)
    def _finalize():
        dot = dot_acc[...]
        num = dot * dot                          # = (dot^2/tt) * tt
        den = xx_acc[...] * tt_acc[...] - num    # = (xx - dot^2/tt) * tt
        ratio = num / den
        # 10 * log10(ratio) with the constant hoisted (log runs on the EUP).
        out_ref[...] = (_TEN_OVER_LN10 * jnp.log(ratio)).astype(out_ref.dtype)


def sisnr_log_ratio(inp, tgt, *, bm=None, tk=8192, vmem_limit_bytes=None):
    """Per-sample 10*log10(SI-SNR ratio), shape (B,)."""
    assert inp.shape == tgt.shape and inp.ndim == 2
    B, T = inp.shape
    itemsize = jnp.dtype(inp.dtype).itemsize

    # Sublane packing: 8 rows for 4-byte dtypes, 16 for bf16, 32 for int8.
    sub = max(8, 32 // itemsize)
    if bm is None:
        bm = sub                     # small batch tile -> many parallel steps
    bm = _round_up(bm, sub)

    # Lane (reduction) tile: multiple of 128, capped so VMEM stays small.
    tk = max(128, _round_up(min(tk, _round_up(T, 128)), 128))

    Bp = _round_up(B, bm)
    Tp = _round_up(T, tk)
    if (Bp, Tp) != (B, T):
        pad = ((0, Bp - B), (0, Tp - T))
        inp = jnp.pad(inp, pad)
        tgt = jnp.pad(tgt, pad)      # zero-padded rows are sliced away below

    grid = (Bp // bm, Tp // tk)

    if vmem_limit_bytes is None:
        # 2 inputs x double buffering x tile bytes, plus generous slack;
        # clamp so it is valid on v5e (16 MiB default) and v7x (64 MiB phys).
        need = 2 * 2 * bm * tk * itemsize
        vmem_limit_bytes = min(max(2 * need, 16 << 20), 48 << 20)

    cost = pl.CostEstimate(
        flops=6 * Bp * Tp,
        transcendentals=Bp,
        bytes_accessed=2 * Bp * Tp * itemsize + 4 * Bp,
    )

    out = pl.pallas_call(
        _sisnr_kernel,
        out_shape=jax.ShapeDtypeStruct((Bp, 1), jnp.float32),
        grid_spec=pltpu.PrefetchScalarGridSpec(
            num_scalar_prefetch=0,
            grid=grid,
            in_specs=[
                pl.BlockSpec((bm, tk), lambda i, k: (i, k)),
                pl.BlockSpec((bm, tk), lambda i, k: (i, k)),
            ],
            out_specs=pl.BlockSpec((bm, 1), lambda i, k: (i, 0)),
            scratch_shapes=[
                pltpu.VMEM((bm, 1), jnp.float32),   # dot accumulator
                pltpu.VMEM((bm, 1), jnp.float32),   # tt accumulator
                pltpu.VMEM((bm, 1), jnp.float32),   # xx accumulator
            ],
        ),
        compiler_params=pltpu.CompilerParams(
            dimension_semantics=("parallel", "arbitrary"),
            vmem_limit_bytes=int(vmem_limit_bytes),
        ),
        cost_estimate=cost,
    )(inp, tgt)
    return out[:B, 0]


def sisnr_loss(inp, tgt, reduction='mean', **tile_kwargs):
    """Matches SISNRLoss.forward semantics (negative SI-SNR in dB)."""
    if reduction not in ['mean', 'sum', None]:
        raise ValueError(
            f"'reduction' argument should be one of ['mean', 'sum', None], "
            f"but was {reduction}")
    log_ratio = sisnr_log_ratio(inp, tgt, **tile_kwargs)
    if reduction == 'mean':
        return -jnp.mean(log_ratio)
    elif reduction == 'sum':
        return -jnp.sum(log_ratio)
    else:
        return -log_ratio


def _reference(inp, tgt, reduction='mean'):
    # Pure-JAX reference mirroring the PyTorch code exactly.
    scale = jnp.diagonal(jnp.matmul(tgt, inp.T)) / jnp.sum(tgt ** 2, axis=-1)
    scale = scale.reshape(scale.shape[0], 1)
    ratio = jnp.sum((scale * tgt) ** 2, axis=-1) / \
            jnp.sum((inp - scale * tgt) ** 2, axis=-1)
    log_ratio = 10 * jnp.log10(ratio)
    if reduction == 'mean':
        return -jnp.mean(log_ratio)
    elif reduction == 'sum':
        return -jnp.sum(log_ratio)
    return -log_ratio


if __name__ == "__main__":
    key = jax.random.PRNGKey(0)
    k1, k2 = jax.random.split(key)
    B, T = 8, 256  # small (batch, signal_length)

    target = jax.random.normal(k1, (B, T), dtype=jnp.float32)
    noise = 0.3 * jax.random.normal(k2, (B, T), dtype=jnp.float32)
    degraded = target + noise

    # Default tiling (single reduction step at this tiny T).
    loss_mean = sisnr_loss(degraded, target, reduction='mean')
    loss_sum = sisnr_loss(degraded, target, reduction='sum')
    loss_none = sisnr_loss(degraded, target, reduction=None)
    # Force the multi-step (tiled) reduction path as well.
    loss_none_tiled = sisnr_loss(degraded, target, reduction=None, tk=128)
    jax.block_until_ready((loss_mean, loss_sum, loss_none, loss_none_tiled))

    # Correctness check against the pure-JAX reference.
    ref_mean = _reference(degraded, target, 'mean')
    ref_sum = _reference(degraded, target, 'sum')
    ref_none = _reference(degraded, target, None)
    assert jnp.allclose(loss_mean, ref_mean, rtol=1e-4, atol=5e-4)
    assert jnp.allclose(loss_sum, ref_sum, rtol=1e-4, atol=5e-3)
    assert jnp.allclose(loss_none, ref_none, rtol=1e-4, atol=5e-4)
    assert jnp.allclose(loss_none_tiled, ref_none, rtol=1e-4, atol=5e-4)

    print("KERNEL_OK")
</pallas_src>

<mosaic_0001>
module attributes {stable_mosaic.version = 11 : i64} {
  func.func @_sisnr_kernel(%arg0: i32, %arg1: i32, %arg2: memref<8x256xf32, #tpu.memory_space<vmem>>, %arg3: memref<8x256xf32, #tpu.memory_space<vmem>>, %arg4: memref<8x1xf32, #tpu.memory_space<vmem>>, %arg5: memref<8x1xf32, #tpu.memory_space<vmem>>, %arg6: memref<8x1xf32, #tpu.memory_space<vmem>>, %arg7: memref<8x1xf32, #tpu.memory_space<vmem>>) attributes {dimension_semantics = [#tpu.dimension_semantics<parallel>, #tpu.dimension_semantics<arbitrary>], iteration_bounds = array<i64: 1, 1>, scalar_prefetch = 0 : i64, scratch_operands = 3 : i64, tpu.core_type = #tpu.core_type<tc>, window_params = [{transform_indices = @transform_0, window_bounds = array<i64: 8, 256>}, {transform_indices = @transform_1, window_bounds = array<i64: 8, 256>}, {transform_indices = @transform_2, window_bounds = array<i64: 8, 1>}]} {
    %c0_i32 = arith.constant 0 : i32
    %0 = arith.cmpi eq, %arg1, %c0_i32 : i32
    %1 = arith.extui %0 : i1 to i32
    %c0_i32_0 = arith.constant 0 : i32
    %2 = arith.cmpi ne, %1, %c0_i32_0 : i32
    scf.if %2 {
      %cst_20 = arith.constant 0.000000e+00 : f32
      %26 = vector.broadcast %cst_20 : f32 to vector<8x1xf32>
      %c0_21 = arith.constant 0 : index
      %c0_22 = arith.constant 0 : index
      %27 = vector.load %arg5[%c0_21, %c0_22] : memref<8x1xf32, #tpu.memory_space<vmem>>, vector<8x1xf32>
      tpu.vector_store %arg5[%c0_21, %c0_22], %26 {strides = array<i32>} : memref<8x1xf32, #tpu.memory_space<vmem>>, vector<8x1xf32>,
      %cst_23 = arith.constant 0.000000e+00 : f32
      %28 = vector.broadcast %cst_23 : f32 to vector<8x1xf32>
      %c0_24 = arith.constant 0 : index
      %c0_25 = arith.constant 0 : index
      %29 = vector.load %arg6[%c0_24, %c0_25] : memref<8x1xf32, #tpu.memory_space<vmem>>, vector<8x1xf32>
      tpu.vector_store %arg6[%c0_24, %c0_25], %28 {strides = array<i32>} : memref<8x1xf32, #tpu.memory_space<vmem>>, vector<8x1xf32>,
      %cst_26 = arith.constant 0.000000e+00 : f32
      %30 = vector.broadcast %cst_26 : f32 to vector<8x1xf32>
      %c0_27 = arith.constant 0 : index
      %c0_28 = arith.constant 0 : index
      %31 = vector.load %arg7[%c0_27, %c0_28] : memref<8x1xf32, #tpu.memory_space<vmem>>, vector<8x1xf32>
      tpu.vector_store %arg7[%c0_27, %c0_28], %30 {strides = array<i32>} : memref<8x1xf32, #tpu.memory_space<vmem>>, vector<8x1xf32>,
    } else {
    }
    %c0 = arith.constant 0 : index
    %c0_1 = arith.constant 0 : index
    %3 = vector.load %arg2[%c0, %c0_1] : memref<8x256xf32, #tpu.memory_space<vmem>>, vector<8x256xf32>
    %c0_2 = arith.constant 0 : index
    %c0_3 = arith.constant 0 : index
    %4 = vector.load %arg3[%c0_2, %c0_3] : memref<8x256xf32, #tpu.memory_space<vmem>>, vector<8x256xf32>
    %c0_4 = arith.constant 0 : index
    %c0_5 = arith.constant 0 : index
    %5 = vector.load %arg5[%c0_4, %c0_5] : memref<8x1xf32, #tpu.memory_space<vmem>>, vector<8x1xf32>
    %6 = arith.mulf %4, %3 : vector<8x256xf32>
    %cst = arith.constant dense<0.000000e+00> : vector<8xf32>
    %7 = vector.multi_reduction <add>, %6, %cst [1] : vector<8x256xf32> to vector<8xf32>
    %8 = vector.shape_cast %7 : vector<8xf32> to vector<8x1xf32>
    %9 = arith.addf %5, %8 : vector<8x1xf32>
    %c0_6 = arith.constant 0 : index
    %c0_7 = arith.constant 0 : index
    %10 = vector.load %arg5[%c0_6, %c0_7] : memref<8x1xf32, #tpu.memory_space<vmem>>, vector<8x1xf32>
    tpu.vector_store %arg5[%c0_6, %c0_7], %9 {strides = array<i32>} : memref<8x1xf32, #tpu.memory_space<vmem>>, vector<8x1xf32>,
    %c0_8 = arith.constant 0 : index
    %c0_9 = arith.constant 0 : index
    %11 = vector.load %arg6[%c0_8, %c0_9] : memref<8x1xf32, #tpu.memory_space<vmem>>, vector<8x1xf32>
    %12 = arith.mulf %4, %4 : vector<8x256xf32>
    %cst_10 = arith.constant dense<0.000000e+00> : vector<8xf32>
    %13 = vector.multi_reduction <add>, %12, %cst_10 [1] : vector<8x256xf32> to vector<8xf32>
    %14 = vector.shape_cast %13 : vector<8xf32> to vector<8x1xf32>
    %15 = arith.addf %11, %14 : vector<8x1xf32>
    %c0_11 = arith.constant 0 : index
    %c0_12 = arith.constant 0 : index
    %16 = vector.load %arg6[%c0_11, %c0_12] : memref<8x1xf32, #tpu.memory_space<vmem>>, vector<8x1xf32>
    tpu.vector_store %arg6[%c0_11, %c0_12], %15 {strides = array<i32>} : memref<8x1xf32, #tpu.memory_space<vmem>>, vector<8x1xf32>,
    %c0_13 = arith.constant 0 : index
    %c0_14 = arith.constant 0 : index
    %17 = vector.load %arg7[%c0_13, %c0_14] : memref<8x1xf32, #tpu.memory_space<vmem>>, vector<8x1xf32>
    %18 = arith.mulf %3, %3 : vector<8x256xf32>
    %cst_15 = arith.constant dense<0.000000e+00> : vector<8xf32>
    %19 = vector.multi_reduction <add>, %18, %cst_15 [1] : vector<8x256xf32> to vector<8xf32>
    %20 = vector.shape_cast %19 : vector<8xf32> to vector<8x1xf32>
    %21 = arith.addf %17, %20 : vector<8x1xf32>
    %c0_16 = arith.constant 0 : index
    %c0_17 = arith.constant 0 : index
    %22 = vector.load %arg7[%c0_16, %c0_17] : memref<8x1xf32, #tpu.memory_space<vmem>>, vector<8x1xf32>
    tpu.vector_store %arg7[%c0_16, %c0_17], %21 {strides = array<i32>} : memref<8x1xf32, #tpu.memory_space<vmem>>, vector<8x1xf32>,
    %c0_i32_18 = arith.constant 0 : i32
    %23 = arith.cmpi eq, %arg1, %c0_i32_18 : i32
    %24 = arith.extui %23 : i1 to i32
    %c0_i32_19 = arith.constant 0 : i32
    %25 = arith.cmpi ne, %24, %c0_i32_19 : i32
    scf.if %25 {
      %c0_20 = arith.constant 0 : index
      %c0_21 = arith.constant 0 : index
      %26 = vector.load %arg5[%c0_20, %c0_21] : memref<8x1xf32, #tpu.memory_space<vmem>>, vector<8x1xf32>
      %27 = arith.mulf %26, %26 : vector<8x1xf32>
      %c0_22 = arith.constant 0 : index
      %c0_23 = arith.constant 0 : index
      %28 = vector.load %arg7[%c0_22, %c0_23] : memref<8x1xf32, #tpu.memory_space<vmem>>, vector<8x1xf32>
      %c0_24 = arith.constant 0 : index
      %c0_25 = arith.constant 0 : index
      %29 = vector.load %arg6[%c0_24, %c0_25] : memref<8x1xf32, #tpu.memory_space<vmem>>, vector<8x1xf32>
      %30 = arith.mulf %28, %29 : vector<8x1xf32>
      %31 = arith.subf %30, %27 : vector<8x1xf32>
      %32 = arith.divf %27, %31 : vector<8x1xf32>
      %33 = math.log %32 : vector<8x1xf32>
      %cst_26 = arith.constant 4.34294462 : f32
      %34 = vector.broadcast %cst_26 : f32 to vector<8x1xf32>
      %35 = arith.mulf %34, %33 : vector<8x1xf32>
      %c0_27 = arith.constant 0 : index
      %c0_28 = arith.constant 0 : index
      %36 = vector.load %arg4[%c0_27, %c0_28] : memref<8x1xf32, #tpu.memory_space<vmem>>, vector<8x1xf32>
      tpu.vector_store %arg4[%c0_27, %c0_28], %35 {strides = array<i32>} : memref<8x1xf32, #tpu.memory_space<vmem>>, vector<8x1xf32>,
    } else {
    }
    return
  }
  func.func @transform_0(%arg0: i32, %arg1: i32) -> (i32, i32) {
    %c0_i32 = arith.constant 0 : i32
    return %arg0, %arg1 : i32, i32
  }
  func.func @transform_1(%arg0: i32, %arg1: i32) -> (i32, i32) {
    %c0_i32 = arith.constant 0 : i32
    return %arg0, %arg1 : i32, i32
  }
  func.func @transform_2(%arg0: i32, %arg1: i32) -> (i32, i32) {
    %c0_i32 = arith.constant 0 : i32
    %c0_i32_0 = arith.constant 0 : i32
    return %arg0, %c0_i32 : i32, i32
  }
}

</mosaic_0001>

<llo_original>
// kernel: tpu_custom_call.1
$region0: #{tpu_custom_call.1}
  #allocation0 [shape = 'u32[]', space=smem, size = 0x4, offset = 0x4, fixed_abs, tag = 'smem constant byte address 0x4 - core index']
  #allocation1 [shape = 'u32[144,128]{1,0:T(1,128)}', space=vmem, size = 0x12000, scoped, tag = 'internal scratch']
  #allocation2 [shape = 'f32[8,1]{1,0:T(8,128)}', space=vmem, size = 0x1000, scoped, tag = 'scratch operand']
  #allocation3 [shape = 'f32[8,1]{1,0:T(8,128)}', space=vmem, size = 0x1000, scoped, tag = 'scratch operand']
  #allocation4 [shape = 'f32[8,1]{1,0:T(8,128)}', space=vmem, size = 0x1000, scoped, tag = 'scratch operand']
  %s0 = inlined_call_operand.hbm [shape: f32[8,256], index: 0, kind: input, shape index: {}]
  %s1 = inlined_call_operand.hbm [shape: f32[8,256], index: 1, kind: input, shape index: {}]
  %s2 = inlined_call_operand.vmem [shape: f32[8,1], index: 2, kind: output, shape index: {}]
  %s3 = sld [smem:[#allocation0]]
  $region34: #{tpu_custom_call.1} parent=0
    _
  %s5 = ssub.s32 1, %s3
  %s6 = scalar_select 0, %s5, %s3
  $region1: #{tpu_custom_call.1} parent=0
    #allocation5 [shape = 'u8[8192]{0}', space=vmem, size = 0x2000, scoped, tag = 'input window, operand 0, single buffered']
    #allocation6 [shape = 's32[1]{0}', space=sflag, size = 0x4, scoped, tag = 'scoped memory for tpu_custom_call.1']
    #allocation7 [shape = 'u8[8192]{0}', space=vmem, size = 0x2000, scoped, tag = 'input window, operand 1, single buffered']
    #allocation8 [shape = 's32[1]{0}', space=sflag, size = 0x4, scoped, tag = 'scoped memory for tpu_custom_call.1']
    %7 = vsyncpa [#allocation6], 0
    %8 = vsyncpa [#allocation8], 0
    // Predicated region
    $region2: #{tpu_custom_call.1} parent=1 // pred_check
      _
    $region3: #{tpu_custom_call.1} parent=1 // pred_check_branch
      %10 = sbr.rel (0) target = $region5
    $region4: #{tpu_custom_call.1} parent=1 // pred_region
      %s12 = ssub.s32 256, 256
      %13 = vsyncadd [#allocation6], %s12
      %s15 = sshll.u32 [#allocation5], 4
      %s16 = int_to_ptr.vmem [resolvable:$true] %s15
      %18 = dma.hbm_to_vmem [thread:$0]  %s0, 256, %s16, [#allocation6]
    $region5: #{tpu_custom_call.1} parent=1 // pred_fallthru
      _
    // Predicated region
    $region6: #{tpu_custom_call.1} parent=1 // pred_check
      _
    $region7: #{tpu_custom_call.1} parent=1 // pred_check_branch
      %20 = sbr.rel (0) target = $region9
    $region8: #{tpu_custom_call.1} parent=1 // pred_region
      %s22 = ssub.s32 256, 256
      %23 = vsyncadd [#allocation8], %s22
      %s25 = sshll.u32 [#allocation7], 4
      %s26 = int_to_ptr.vmem [resolvable:$true] %s25
      %28 = dma.hbm_to_vmem [thread:$0]  %s1, 256, %s26, [#allocation8]
    $region9: #{tpu_custom_call.1} parent=1 // pred_fallthru
      _
    // Predicated region
    $region10: #{tpu_custom_call.1} parent=1 // pred_check
      _
    $region11: #{tpu_custom_call.1} parent=1 // pred_check_branch
      %30 = sbr.rel (0) target = $region13
    $region12: #{tpu_custom_call.1} parent=1 // pred_region
      %31 = dma.done [#allocation6], 256
    $region13: #{tpu_custom_call.1} parent=1 // pred_fallthru
      _
    // Predicated region
    $region14: #{tpu_custom_call.1} parent=1 // pred_check
      _
    $region15: #{tpu_custom_call.1} parent=1 // pred_check_branch
      %33 = sbr.rel (0) target = $region17
    $region16: #{tpu_custom_call.1} parent=1 // pred_region
      %34 = dma.done [#allocation8], 256
    $region17: #{tpu_custom_call.1} parent=1 // pred_fallthru
      _
    %p35 = scmp.eq.s32.totalorder 0, 0
    // Predicated region
    $region18: #{tpu_custom_call.1} parent=1 // pred_check
      %p36 = pneg %p35
    $region19: #{tpu_custom_call.1} parent=1 // pred_check_branch
      %38 = sbr.rel (%p36) target = $region21
    $region20: #{tpu_custom_call.1} parent=1 // pred_region
      %vm39 = vcmask 7168
      %40 = vst.msk [vmem:[#allocation2] sm:$0xff] %vm39, 0.0
      %41 = vst.msk [vmem:[#allocation3] sm:$0xff] %vm39, 0.0
      %42 = vst.msk [vmem:[#allocation4] sm:$0xff] %vm39, 0.0
    $region21: #{tpu_custom_call.1} parent=1 // pred_fallthru
      _
    %v43 = vld [vmem:[#allocation5] sm:$0xff]
    %v44 = vld [vmem:[#allocation5 + $0x8] sm:$0xff]
    %v45 = vld [vmem:[#allocation7] sm:$0xff]
    %v46 = vld [vmem:[#allocation7 + $0x8] sm:$0xff]
    %v47 = vld [vmem:[#allocation2] sm:$0xff]
    %v48 = vmul.f32 %v45, %v43
    %v49 = vmul.f32 %v46, %v44
    %v50 = vadd.f32 %v48, %v49
    %51 = vadd.xlane.f32.xlu0 %v50
    %v52 = vpop.xlane.xlu0 %51
    %v53 = vadd.f32 %v47, %v52
    %vm54 = vcmask 7168
    %55 = vst.msk [vmem:[#allocation2] sm:$0xff] %vm54, %v53
    %v56 = vld [vmem:[#allocation3] sm:$0xff]
    %v57 = vmul.f32 %v45, %v45
    %v58 = vmul.f32 %v46, %v46
    %v59 = vadd.f32 %v57, %v58
    %60 = vadd.xlane.f32.xlu0 %v59
    %v61 = vpop.xlane.xlu0 %60
    %v62 = vadd.f32 %v56, %v61
    %63 = vst.msk [vmem:[#allocation3] sm:$0xff] %vm54, %v62
    %v64 = vld [vmem:[#allocation4] sm:$0xff]
    %v65 = vmul.f32 %v43, %v43
    %v66 = vmul.f32 %v44, %v44
    %v67 = vadd.f32 %v65, %v66
    %68 = vadd.xlane.f32.xlu0 %v67
    %v69 = vpop.xlane.xlu0 %68
    %v70 = vadd.f32 %v64, %v69
    %71 = vst.msk [vmem:[#allocation4] sm:$0xff] %vm54, %v70
    // Predicated region
    $region22: #{tpu_custom_call.1} parent=1 // pred_check
      %p72 = pneg %p35
    $region23: #{tpu_custom_call.1} parent=1 // pred_check_branch
      %74 = sbr.rel (%p72) target = $region25
    $region24: #{tpu_custom_call.1} parent=1 // pred_region
      %v75 = vld [vmem:[#allocation2] sm:$0xff]
      %v76 = vmul.f32 %v75, %v75
      %v77 = vld [vmem:[#allocation4] sm:$0xff]
      %v78 = vld [vmem:[#allocation3] sm:$0xff]
      %v79 = vmul.f32 %v77, %v78
      %v80 = vsub.f32 %v79, %v76
      %v81 = vrcp.pop %v80
      %v82 = vmul.f32 %v76, %v81
      %v83 = vlog2.pop %v82
      %v84 = vmul.f32 %v83, 0.6931472
      %v85 = vmul.f32 %v84, 4.3429446
      %86 = vst.msk [vmem:[%s2] sm:$0xff] %vm54, %v85
    $region25: #{tpu_custom_call.1} parent=1 // pred_fallthru
      _
    // Predicated region
    $region26: #{tpu_custom_call.1} parent=1 // pred_check
      _
    $region27: #{tpu_custom_call.1} parent=1 // pred_check_branch
      %88 = sbr.rel (0) target = $region29
    $region28: #{tpu_custom_call.1} parent=1 // pred_region
      _
    $region29: #{tpu_custom_call.1} parent=1 // pred_fallthru
      _
    // Predicated region
    $region30: #{tpu_custom_call.1} parent=1 // pred_check
      _
    $region31: #{tpu_custom_call.1} parent=1 // pred_check_branch
      %90 = sbr.rel (0) target = $region33
    $region32: #{tpu_custom_call.1} parent=1 // pred_region
      _
    $region33: #{tpu_custom_call.1} parent=1 // pred_fallthru
      _
    %91 = vsyncpa [#allocation6], 1
    %92 = vsyncpa [#allocation8], 1

</llo_original>
